<compile_context>
chip_gen: v7x
topology: tpu7x:2x2x1
jax: 0.10.0
libtpu: 0.0.40
codegen_flags: <defaults>
</compile_context>

<pallas_src>
import jax
import jax.numpy as jnp
from jax.experimental import pallas as pl
from jax.experimental.pallas import tpu as pltpu


def _make_kernel(type_loss, n_rows, tile_rows, needs_row_mask):
    """Per-tile kernel: emits sum over the tile's rows of log p_gold (a (1,1) partial)."""

    def kernel(logits_ref, mask_ref, out_ref):
        x = logits_ref[...].astype(jnp.float32)        # (TM, C), cast in VMEM
        mask = mask_ref[...] != 0                       # int8 -> bool, (TM, C)

        # One shared rowmax + exp pass, reused by every branch needing a logsumexp.
        m = jnp.max(x, axis=-1, keepdims=True)          # (TM, 1)
        e = jnp.exp(x - m)                              # (TM, C) single EUP pass
        lse_all = m + jnp.log(jnp.sum(e, axis=-1, keepdims=True))

        if type_loss == 'log_sum':
            # lse over positives, derived from the shared exp pass.
            # (the reference's exp(-10000 - m) filler terms are exactly 0 in f32)
            pos_sum_e = jnp.sum(jnp.where(mask, e, 0.0), axis=-1, keepdims=True)
            lse_gold = m + jnp.log(pos_sum_e)
            row = lse_gold - lse_all
        elif type_loss == 'max_min':
            gold = jnp.where(mask, x, 10000.0)
            row = jnp.min(gold, axis=-1, keepdims=True) - lse_all
        elif type_loss == 'sum_log':
            num_pos = jnp.sum(jnp.where(mask, 1.0, 0.0), axis=-1, keepdims=True)
            gold_sum = jnp.sum(jnp.where(mask, x, 0.0), axis=-1, keepdims=True)
            # exact reciprocal (per-row, (TM,1) only); NaN if a row has no
            # positives, matching the PyTorch reference's 0/0 behavior.
            row = gold_sum * pl.reciprocal(num_pos) - lse_all
        elif type_loss == 'sum_log_nce':
            gold_sum = jnp.sum(jnp.where(mask, x, 0.0), axis=-1, keepdims=True)
            # logsumexp over negatives from the same shared exp pass; -inf if a
            # row has no negatives (matches the reference's -inf fill).
            neg_sum_e = jnp.sum(jnp.where(mask, 0.0, e), axis=-1, keepdims=True)
            neg_lse = m + jnp.log(neg_sum_e)            # (TM, 1)
            mx = jnp.maximum(x, neg_lse)
            ladd = mx + jnp.log(jnp.exp(x - mx) + jnp.exp(neg_lse - mx))
            norm = jnp.sum(jnp.where(mask, ladd, 0.0), axis=-1, keepdims=True)
            row = gold_sum - norm
        else:
            raise ValueError('wrong type of multi-label loss')

        if needs_row_mask:
            # Last tile may run past N; zero the contribution of padded rows.
            ridx = (pl.program_id(0) * tile_rows
                    + jax.lax.broadcasted_iota(jnp.int32, (tile_rows, 1), 0))
            row = jnp.where(ridx < n_rows, row, 0.0)

        out_ref[...] = jnp.sum(row, axis=0, keepdims=True)   # (1, 1) partial

    return kernel


def multi_label_loss(logits, label_marks, type_loss, reduction='sum',
                     tile_rows=None):
    """Pallas-backed equivalent of MultiLabelLoss(type_loss, reduction)."""
    assert type_loss in ['log_sum', 'sum_log', 'sum_log_nce', 'max_min']
    n, c = logits.shape

    # 1 B/elem mask; logits stay in their native dtype (bf16/f32) for the DMA.
    mask_i8 = (label_marks != 0).astype(jnp.int8)

    # Row-tile sizing: 2 inputs x 2 pipeline buffers of (TM, C) must stay well
    # under the 32 MiB scoped VMEM we request (safe on v5e/v6e/v7x alike).
    if tile_rows is None:
        logit_bytes = jnp.dtype(logits.dtype).itemsize
        per_row_bytes = c * (logit_bytes + 1)
        budget = 6 * 1024 * 1024                      # per (logits+mask) tile
        tile_rows = max(32, min(1024, budget // max(per_row_bytes, 1)))
        tile_rows = (tile_rows // 32) * 32            # int8 sublane tile = 32
    if n <= tile_rows:
        tile_rows = n                                  # single full-dim block
    grid = pl.cdiv(n, tile_rows)
    needs_row_mask = (grid * tile_rows != n)
    # TODO(synk): for very large C (tens of thousands of candidates) add a
    # second 'arbitrary' lane-axis grid dim with a streaming logsumexp/min/sum.

    kernel = _make_kernel(type_loss, n, tile_rows, needs_row_mask)

    partials = pl.pallas_call(
        kernel,
        grid=(grid,),
        in_specs=[pl.BlockSpec((tile_rows, c), lambda i: (i, 0)),
                  pl.BlockSpec((tile_rows, c), lambda i: (i, 0))],
        # each grid step owns its own (1,1) partial -> 'parallel' axis lets the
        # two v7x TensorCores split the row range.
        out_specs=pl.BlockSpec((1, 1), lambda i: (i, 0)),
        out_shape=jax.ShapeDtypeStruct((grid, 1), jnp.float32),
        compiler_params=pltpu.CompilerParams(
            dimension_semantics=("parallel",),
            vmem_limit_bytes=32 * 1024 * 1024),
    )(logits, mask_i8)

    loss = -jnp.sum(partials)
    if reduction == 'mean':
        loss = loss / n
    return loss


# ---------------- pure-JAX reference (mirrors the PyTorch code) ----------------
def _ref_loss(logits, mask, type_loss, reduction='sum'):
    logits = logits.astype(jnp.float32)
    mask = mask.astype(bool)
    if type_loss == 'log_sum':
        gold = jnp.where(mask, logits, -10000.0)
        row = jax.nn.logsumexp(gold, -1) - jax.nn.logsumexp(logits, -1)
    elif type_loss == 'max_min':
        gold = jnp.where(mask, logits, 10000.0)
        row = jnp.min(gold, -1) - jax.nn.logsumexp(logits, -1)
    elif type_loss == 'sum_log':
        num_pos = jnp.sum(mask, -1)
        gold_sum = jnp.sum(jnp.where(mask, logits, 0.0), -1)
        row = gold_sum / num_pos - jax.nn.logsumexp(logits, -1)
    elif type_loss == 'sum_log_nce':
        gold_sum = jnp.sum(jnp.where(mask, logits, 0.0), -1)
        neg = jnp.where(mask, -jnp.inf, logits)
        neg_lse = jax.nn.logsumexp(neg, -1, keepdims=True)
        row = gold_sum - jnp.sum(
            jnp.where(mask, jnp.logaddexp(logits, neg_lse), 0.0), -1)
    else:
        raise ValueError('wrong type of multi-label loss')
    loss = -jnp.sum(row)
    if reduction == 'mean':
        loss = loss / logits.shape[0]
    return loss


if __name__ == "__main__":
    key = jax.random.PRNGKey(0)
    k1, k2, k3, k4 = jax.random.split(key, 4)

    # Small E2M x TC case (single full-array tile), f32 logits.
    N, C = 8, 16
    logits = jax.random.normal(k1, (N, C), dtype=jnp.float32)
    mask = jax.random.uniform(k2, (N, C)) < 0.3
    # Guarantee at least one positive and one negative per row.
    mask = mask.at[:, 0].set(True).at[:, 1].set(False)

    for type_loss in ['log_sum', 'sum_log', 'sum_log_nce', 'max_min']:
        out = jax.block_until_ready(
            multi_label_loss(logits, mask, type_loss, reduction='sum'))
        ref = _ref_loss(logits, mask, type_loss, 'sum')
        assert jnp.allclose(out, ref, rtol=1e-4, atol=1e-4), \
            (type_loss, float(out), float(ref))

    # 'mean' reduction once.
    out_m = jax.block_until_ready(
        multi_label_loss(logits, mask, 'log_sum', reduction='mean'))
    ref_m = _ref_loss(logits, mask, 'log_sum', 'mean')
    assert jnp.allclose(out_m, ref_m, rtol=1e-4, atol=1e-4)

    # Multi-tile path with a ragged last tile (exercises row masking, int8 mask
    # tiling, bf16 logits DMA, and the partial-sum 'parallel' output).
    N2, C2 = 80, 128
    logits2 = jax.random.normal(k3, (N2, C2), dtype=jnp.bfloat16)
    mask2 = jax.random.uniform(k4, (N2, C2)) < 0.25
    mask2 = mask2.at[:, 0].set(True).at[:, 1].set(False)
    for type_loss in ['log_sum', 'sum_log', 'sum_log_nce', 'max_min']:
        out2 = jax.block_until_ready(
            multi_label_loss(logits2, mask2, type_loss, 'sum', tile_rows=32))
        ref2 = _ref_loss(logits2, mask2, type_loss, 'sum')
        assert jnp.allclose(out2, ref2, rtol=1e-3, atol=1e-3), \
            (type_loss, float(out2), float(ref2))

    print("KERNEL_OK")
</pallas_src>

<mosaic_0001>
module attributes {stable_mosaic.version = 11 : i64} {
  func.func @kernel(%arg0: i32, %arg1: memref<8x16xf32, #tpu.memory_space<vmem>>, %arg2: memref<8x16xi8, #tpu.memory_space<vmem>>, %arg3: memref<1x1xf32, #tpu.memory_space<vmem>>) attributes {dimension_semantics = [#tpu.dimension_semantics<parallel>], iteration_bounds = array<i64: 1>, scalar_prefetch = 0 : i64, scratch_operands = 0 : i64, tpu.core_type = #tpu.core_type<tc>, window_params = [{transform_indices = @transform_0, window_bounds = array<i64: 8, 16>}, {transform_indices = @transform_1, window_bounds = array<i64: 8, 16>}, {transform_indices = @transform_2, window_bounds = array<i64: 1, 1>}]} {
    %c0 = arith.constant 0 : index
    %c0_0 = arith.constant 0 : index
    %0 = vector.load %arg1[%c0, %c0_0] : memref<8x16xf32, #tpu.memory_space<vmem>>, vector<8x16xf32>
    %c0_1 = arith.constant 0 : index
    %c0_2 = arith.constant 0 : index
    %1 = vector.load %arg2[%c0_1, %c0_2] : memref<8x16xi8, #tpu.memory_space<vmem>>, vector<8x16xi8>
    %c0_i8 = arith.constant 0 : i8
    %2 = vector.broadcast %c0_i8 : i8 to vector<8x16xi8>
    %3 = arith.cmpi ne, %1, %2 : vector<8x16xi8>
    %cst = arith.constant dense<0xFF800000> : vector<8xf32>
    %4 = vector.multi_reduction <maximumf>, %0, %cst [1] : vector<8x16xf32> to vector<8xf32>
    %5 = vector.shape_cast %4 : vector<8xf32> to vector<8x1xf32>
    %6 = vector.broadcast %5 : vector<8x1xf32> to vector<8x16xf32>
    %7 = arith.subf %0, %6 : vector<8x16xf32>
    %8 = math.exp %7 : vector<8x16xf32>
    %cst_3 = arith.constant dense<0.000000e+00> : vector<8xf32>
    %9 = vector.multi_reduction <add>, %8, %cst_3 [1] : vector<8x16xf32> to vector<8xf32>
    %10 = vector.shape_cast %9 : vector<8xf32> to vector<8x1xf32>
    %11 = math.log %10 : vector<8x1xf32>
    %12 = arith.addf %5, %11 : vector<8x1xf32>
    %cst_4 = arith.constant 0.000000e+00 : f32
    %13 = vector.broadcast %cst_4 : f32 to vector<8x16xf32>
    %14 = arith.select %3, %8, %13 : vector<8x16xi1>, vector<8x16xf32>
    %cst_5 = arith.constant dense<0.000000e+00> : vector<8xf32>
    %15 = vector.multi_reduction <add>, %14, %cst_5 [1] : vector<8x16xf32> to vector<8xf32>
    %16 = vector.shape_cast %15 : vector<8xf32> to vector<8x1xf32>
    %17 = math.log %16 : vector<8x1xf32>
    %18 = arith.addf %5, %17 : vector<8x1xf32>
    %19 = arith.subf %18, %12 : vector<8x1xf32>
    %cst_6 = arith.constant dense<0.000000e+00> : vector<1xf32>
    %20 = vector.multi_reduction <add>, %19, %cst_6 [0] : vector<8x1xf32> to vector<1xf32>
    %21 = vector.shape_cast %20 : vector<1xf32> to vector<1x1xf32>
    %c0_7 = arith.constant 0 : index
    %c0_8 = arith.constant 0 : index
    %22 = vector.load %arg3[%c0_7, %c0_8] : memref<1x1xf32, #tpu.memory_space<vmem>>, vector<1x1xf32>
    tpu.vector_store %arg3[%c0_7, %c0_8], %21 {strides = array<i32>} : memref<1x1xf32, #tpu.memory_space<vmem>>, vector<1x1xf32>,
    return
  }
  func.func @transform_0(%arg0: i32) -> (i32, i32) {
    %c0_i32 = arith.constant 0 : i32
    %c0_i32_0 = arith.constant 0 : i32
    return %arg0, %c0_i32 : i32, i32
  }
  func.func @transform_1(%arg0: i32) -> (i32, i32) {
    %c0_i32 = arith.constant 0 : i32
    %c0_i32_0 = arith.constant 0 : i32
    return %arg0, %c0_i32 : i32, i32
  }
  func.func @transform_2(%arg0: i32) -> (i32, i32) {
    %c0_i32 = arith.constant 0 : i32
    %c0_i32_0 = arith.constant 0 : i32
    return %arg0, %c0_i32 : i32, i32
  }
}

</mosaic_0001>

<llo_original>
// kernel: tpu_custom_call.1
$region0: #{tpu_custom_call.1}
  #allocation0 [shape = 'u32[]', space=smem, size = 0x4, offset = 0x4, fixed_abs, tag = 'smem constant byte address 0x4 - core index']
  #allocation1 [shape = 'u32[144,128]{1,0:T(1,128)}', space=vmem, size = 0x12000, scoped, tag = 'internal scratch']
  %s0 = inlined_call_operand.hbm [shape: f32[8,16], index: 0, kind: input, shape index: {}]
  %s1 = inlined_call_operand.vmem [shape: s8[8,16], index: 1, kind: input, shape index: {}]
  %s2 = inlined_call_operand.hbm [shape: f32[1,1], index: 2, kind: output, shape index: {}]
  %s3 = sld [smem:[#allocation0]]
  $region22: #{tpu_custom_call.1} parent=0
    _
  %s5 = ssub.s32 1, %s3
  %s6 = scalar_select 0, %s5, %s3
  $region1: #{tpu_custom_call.1} parent=0
    #allocation2 [shape = 'u8[4096]{0}', space=vmem, size = 0x1000, scoped, tag = 'input window, operand 0, single buffered']
    #allocation3 [shape = 's32[1]{0}', space=sflag, size = 0x4, scoped, tag = 'scoped memory for tpu_custom_call.1']
    #allocation4 [shape = 's32[1]{0}', space=sflag, size = 0x4, scoped, tag = 'scoped memory for tpu_custom_call.1']
    #allocation5 [shape = 'u8[512]{0}', space=vmem, size = 0x400, scoped, tag = 'output window, operand 0, single buffered']
    %7 = vsyncpa [#allocation3], 0
    %8 = vsyncpa [#allocation4], 0
    // Predicated region
    $region2: #{tpu_custom_call.1} parent=1 // pred_check
      _
    $region3: #{tpu_custom_call.1} parent=1 // pred_check_branch
      %10 = sbr.rel (0) target = $region5
    $region4: #{tpu_custom_call.1} parent=1 // pred_region
      %s12 = ssub.s32 128, 128
      %13 = vsyncadd [#allocation3], %s12
      %s15 = sshll.u32 [#allocation2], 4
      %s16 = int_to_ptr.vmem [resolvable:$true] %s15
      %18 = dma.hbm_to_vmem [thread:$0]  %s0, 128, %s16, [#allocation3]
    $region5: #{tpu_custom_call.1} parent=1 // pred_fallthru
      _
    // Predicated region
    $region6: #{tpu_custom_call.1} parent=1 // pred_check
      _
    $region7: #{tpu_custom_call.1} parent=1 // pred_check_branch
      %20 = sbr.rel (0) target = $region9
    $region8: #{tpu_custom_call.1} parent=1 // pred_region
      _
    $region9: #{tpu_custom_call.1} parent=1 // pred_fallthru
      _
    // Predicated region
    $region10: #{tpu_custom_call.1} parent=1 // pred_check
      _
    $region11: #{tpu_custom_call.1} parent=1 // pred_check_branch
      %22 = sbr.rel (0) target = $region13
    $region12: #{tpu_custom_call.1} parent=1 // pred_region
      %23 = dma.done [#allocation3], 128
    $region13: #{tpu_custom_call.1} parent=1 // pred_fallthru
      _
    %v26 = vld [vmem:[#allocation2] sm:$0xff]
    %v27 = vld [vmem:[%s1] sm:$0x3]
    %vm28 = vnez %v27
    %vm29 = vcmask 130048
    %v30 = vsel %vm29, %v26, -inf
    %31 = vmax.xlane.f32.xlu0 %v30
    %v32 = vpop.xlane.xlu0 %31
    %v33 = vsub.f32 %v26, %v32
    %v34 = vmul.f32 %v33, 1.442695
    %v35 = vpow.pop %v34
    %v36 = vsel %vm29, %v35, 0.0
    %37 = vadd.xlane.f32.xlu0 %v36
    %v38 = vpop.xlane.xlu0 %37
    %v39 = vlog2.pop %v38
    %v40 = vmul.f32 %v39, 0.6931472
    %v41 = vadd.f32 %v32, %v40
    %v42 = vsel %vm28, 16843009, 0
    %v43 = vunpack.c.0.s8 %v42
    %vm44 = vcmp.ne.s32.totalorder %v43, 0
    %v45 = vsel %vm44, %v35, 0.0
    %v46 = vsel %vm29, %v45, 0.0
    %47 = vadd.xlane.f32.xlu0 %v46
    %v48 = vpop.xlane.xlu0 %47
    %v49 = vlog2.pop %v48
    %v50 = vmul.f32 %v49, 0.6931472
    %v51 = vadd.f32 %v32, %v50
    %v52 = vsub.f32 %v51, %v41
    %v53 = vrot.slane %v52, 4
    %v54 = vadd.f32 %v52, %v53
    %v55 = vrot.slane %v54, 2
    %v56 = vadd.f32 %v54, %v55
    %v57 = vrot.slane %v56, 1
    %v58 = vadd.f32 %v56, %v57
    %vm59 = vcmask 0
    %60 = vst.msk [vmem:[#allocation5] sm:$0x1] %vm59, %v58
    // Predicated region
    $region14: #{tpu_custom_call.1} parent=1 // pred_check
      _
    $region15: #{tpu_custom_call.1} parent=1 // pred_check_branch
      %62 = sbr.rel (0) target = $region17
    $region16: #{tpu_custom_call.1} parent=1 // pred_region
      %s64 = ssub.s32 16, 16
      %65 = vsyncadd [#allocation4], %s64
      %s67 = sshll.u32 [#allocation5], 4
      %s68 = int_to_ptr.vmem [resolvable:$true] %s67
      %70 = dma.vmem_to_hbm [thread:$0]  %s68, 16, %s2, [#allocation4]
    $region17: #{tpu_custom_call.1} parent=1 // pred_fallthru
      _
    // Predicated region
    $region18: #{tpu_custom_call.1} parent=1 // pred_check
      _
    $region19: #{tpu_custom_call.1} parent=1 // pred_check_branch
      %72 = sbr.rel (0) target = $region21
    $region20: #{tpu_custom_call.1} parent=1 // pred_region
      %73 = dma.done [#allocation4], 16
    $region21: #{tpu_custom_call.1} parent=1 // pred_fallthru
      _
    %74 = vsyncpa [#allocation3], 1
    %75 = vsyncpa [#allocation4], 1

</llo_original>
